<compile_context>
chip_gen: v6e
topology: v6e:2x2x1
jax: 0.10.0
libtpu: 0.0.40
codegen_flags: <defaults>
</compile_context>

<pallas_src>
import functools

import jax
import jax.numpy as jnp
from jax.experimental import pallas as pl
from jax.experimental.pallas import tpu as pltpu

# ----- LossConfig defaults (use_adaptive_weighting=True overrides schedule) --
TEMPERATURE = 4.0
DISTILLATION_WEIGHT = 0.7
TASK_WEIGHT = 0.3
ATTENTION_WEIGHT = 0.1
FEATURE_WEIGHT = 0.1
CONSISTENCY_WEIGHT = 0.05
IMPORTANT_TOKEN_WEIGHT = 2.0
IGNORE_INDEX = -100

_LANES = 128
_TILE_BUDGET_BYTES = 8 * 1024 * 1024  # 2 tensors x 2 buffers x tile <= 8 MiB


def _pick_row_tile(rows, inner, elt_bytes, budget_bytes=_TILE_BUDGET_BYTES):
    """Largest row tile (multiple of 8, dividing `rows`) whose double-buffered
    two-tensor footprint stays under the budget. Conservative enough for
    v5e/v6e/v7x scoped-VMEM defaults."""
    for t in (1024, 512, 256, 128, 64, 32, 16, 8):
        if rows % t == 0 and 4 * t * inner * elt_bytes <= budget_bytes:
            return t
    return rows


# ---------------------------------------------------------------------------
# Kernel 1: CE + temperature-KL + consistency over (batch, seq-tile) grid.
# ---------------------------------------------------------------------------
def _logits_kernel(labels_ref, ids_ref, stu_ref, tea_ref,
                   ce_ref, kl_ref, cons_ref, prev_row_ref):
    s_idx = pl.program_id(1)

    @pl.when(s_idx == 0)
    def _init():
        ce_ref[...] = jnp.zeros_like(ce_ref)
        kl_ref[...] = jnp.zeros_like(kl_ref)
        cons_ref[...] = jnp.zeros_like(cons_ref)

    labels = labels_ref[0]                         # (TS, 1) int32
    ids = ids_ref[0]                               # (TS, 1) int32
    stu = stu_ref[0].astype(jnp.float32)           # (TS, V)
    tea = tea_ref[0].astype(jnp.float32)           # (TS, V)
    TS, V = stu.shape

    # ---- token importance weights + valid (label != -100) mask -------------
    imp = ((ids >= 1) & (ids <= 5)) | ((ids >= 10) & (ids <= 14))
    tok_w = jnp.where(imp, IMPORTANT_TOKEN_WEIGHT, 1.0).astype(jnp.float32)
    valid = labels != IGNORE_INDEX
    vmask = valid.astype(jnp.float32)

    # ---- cross-entropy (reduction='none', ignore_index=-100) ---------------
    m = jnp.max(stu, axis=-1, keepdims=True)                            # (TS,1)
    safe_lab = jnp.where(valid, labels, 0)
    col = jax.lax.broadcasted_iota(jnp.int32, (TS, V), 1)
    lab_logit = jnp.sum(jnp.where(col == safe_lab, stu, 0.0),
                        axis=-1, keepdims=True)                         # (TS,1)
    lse = m + jnp.log(jnp.sum(jnp.exp(stu - m), axis=-1, keepdims=True))
    ce = lse - lab_logit
    ce_ref[...] += jnp.sum(ce * tok_w * vmask)

    # ---- temperature-scaled KL (reuse m: max(stu/T) == max(stu)/T) ----------
    inv_t = 1.0 / TEMPERATURE
    ss = stu * inv_t
    ts = tea * inv_t
    ms = m * inv_t
    log_zs = jnp.log(jnp.sum(jnp.exp(ss - ms), axis=-1, keepdims=True))
    log_ps = ss - ms - log_zs
    mt = jnp.max(ts, axis=-1, keepdims=True)
    et = jnp.exp(ts - mt)
    zt = jnp.sum(et, axis=-1, keepdims=True)
    pt = et * pl.reciprocal(zt, approx=True)       # EUP; tiny rel. error vs /zt
    log_pt = ts - mt - jnp.log(zt)
    kl_ref[...] += jnp.sum(pt * (log_pt - log_ps))

    # ---- consistency: ||logits[t+1]-logits[t]||_2 over consecutive tokens ---
    shifted = jnp.roll(stu, shift=-1, axis=0)              # row i <- row i+1
    d = shifted - stu
    row_norm = jnp.sqrt(jnp.sum(d * d, axis=-1, keepdims=True))          # (TS,1)
    row = jax.lax.broadcasted_iota(jnp.int32, (TS, 1), 0)
    within = jnp.sum(jnp.where(row < TS - 1, row_norm, 0.0))
    # boundary diff with the last row of the previous sequence tile
    bd = stu[0:1, :] - prev_row_ref[...]
    bnorm = jnp.sqrt(jnp.sum(bd * bd))
    cons_ref[...] += within + jnp.where(s_idx > 0, bnorm, 0.0)
    prev_row_ref[...] = stu[TS - 1:TS, :]          # carry for the next tile


# ---------------------------------------------------------------------------
# Kernel 2: attention transfer (MSE of head-averaged maps), grid (B, rows, H).
# ---------------------------------------------------------------------------
def _attn_kernel(sa_ref, ta_ref, att_ref, acc_ref, *, num_heads):
    r = pl.program_id(1)
    h = pl.program_id(2)

    @pl.when(jnp.logical_and(r == 0, h == 0))
    def _init():
        att_ref[...] = jnp.zeros_like(att_ref)

    @pl.when(h == 0)
    def _reset():
        acc_ref[...] = jnp.zeros_like(acc_ref)

    acc_ref[...] += (sa_ref[0, 0].astype(jnp.float32)
                     - ta_ref[0, 0].astype(jnp.float32))

    @pl.when(h == num_heads - 1)
    def _finalize():
        mean_diff = acc_ref[...] * (1.0 / num_heads)
        att_ref[...] += jnp.sum(mean_diff * mean_diff)


# ---------------------------------------------------------------------------
# Wrapper
# ---------------------------------------------------------------------------
def advanced_distillation_loss(student_logits, teacher_logits, labels, input_ids,
                               student_att, teacher_att, student_hid, teacher_hid,
                               adaptive_weights):
    B, S, V = student_logits.shape
    H = student_att.shape[1]

    labels3 = labels.reshape(B, S, 1).astype(jnp.int32)
    ids3 = input_ids.reshape(B, S, 1).astype(jnp.int32)

    # ----- logits kernel: grid (B, S // TS) ----------------------------------
    logit_bytes = student_logits.dtype.itemsize
    TS = _pick_row_tile(S, V, logit_bytes)
    nS = S // TS

    part_shape = jax.ShapeDtypeStruct((B, 1, _LANES), jnp.float32)
    part_spec_logits = pl.BlockSpec((1, 1, _LANES), lambda b, s: (b, 0, 0))

    logits_cost = pl.CostEstimate(
        flops=14 * B * S * V,
        transcendentals=3 * B * S * V,
        bytes_accessed=2 * B * S * V * logit_bytes + 2 * B * S * 4)

    ce_b, kl_b, cons_b = pl.pallas_call(
        _logits_kernel,
        grid=(B, nS),
        in_specs=[
            pl.BlockSpec((1, TS, 1), lambda b, s: (b, s, 0)),   # labels
            pl.BlockSpec((1, TS, 1), lambda b, s: (b, s, 0)),   # input_ids
            pl.BlockSpec((1, TS, V), lambda b, s: (b, s, 0)),   # student logits
            pl.BlockSpec((1, TS, V), lambda b, s: (b, s, 0)),   # teacher logits
        ],
        out_specs=[part_spec_logits] * 3,
        out_shape=[part_shape] * 3,
        scratch_shapes=[pltpu.VMEM((1, V), jnp.float32)],       # prev-row carry
        compiler_params=pltpu.CompilerParams(
            dimension_semantics=("parallel", "arbitrary"),
            vmem_limit_bytes=32 * 1024 * 1024),
        cost_estimate=logits_cost,
    )(labels3, ids3, student_logits, teacher_logits)

    # ----- attention-transfer kernel: grid (B, S // TR, H) -------------------
    att_bytes = student_att.dtype.itemsize
    TR = _pick_row_tile(S, S, att_bytes)
    nR = S // TR

    attn_cost = pl.CostEstimate(
        flops=4 * B * H * S * S,
        transcendentals=0,
        bytes_accessed=2 * B * H * S * S * att_bytes)

    att_b = pl.pallas_call(
        functools.partial(_attn_kernel, num_heads=H),
        grid=(B, nR, H),
        in_specs=[
            pl.BlockSpec((1, 1, TR, S), lambda b, r, h: (b, h, r, 0)),
            pl.BlockSpec((1, 1, TR, S), lambda b, r, h: (b, h, r, 0)),
        ],
        out_specs=pl.BlockSpec((1, 1, _LANES), lambda b, r, h: (b, 0, 0)),
        out_shape=part_shape,
        scratch_shapes=[pltpu.VMEM((TR, S), jnp.float32)],
        compiler_params=pltpu.CompilerParams(
            dimension_semantics=("parallel", "arbitrary", "arbitrary"),
            vmem_limit_bytes=32 * 1024 * 1024),
        cost_estimate=attn_cost,
    )(student_att, teacher_att)

    # ----- plain-XLA glue -----------------------------------------------------
    ce_sum = jnp.sum(ce_b[:, 0, 0])
    kl_sum = jnp.sum(kl_b[:, 0, 0])
    cons_sum = jnp.sum(cons_b[:, 0, 0])
    att_se = jnp.sum(att_b[:, 0, 0])

    valid_count = jnp.sum((labels != IGNORE_INDEX).astype(jnp.float32))

    task_loss = ce_sum / valid_count                       # CE mean over valid tokens
    kl_loss = (kl_sum / B) * (TEMPERATURE ** 2)            # KLDiv 'batchmean' on (B,S,V): /B
    cons_loss = cons_sum / (B * (S - 1))                   # mean of row-diff norms
    att_loss = att_se / (B * S * S)                        # MSE of head-avg maps (1 layer)
    # Feature-matching MSE: trivial elementwise reduction, kept in plain XLA.
    feat_loss = jnp.mean((student_hid.astype(jnp.float32)
                          - teacher_hid.astype(jnp.float32)) ** 2)

    # adaptive weighting (overrides the progressive schedule, as in PyTorch)
    w = jax.nn.softmax(adaptive_weights)
    distill_w, task_w, att_w, feat_w = w[0], w[1], w[2], w[3]

    total = (task_w * task_loss
             + distill_w * kl_loss
             + att_w * att_loss
             + feat_w * feat_loss
             + CONSISTENCY_WEIGHT * cons_loss)

    loss_dict = {
        "task_loss": task_loss,
        "distillation_loss": kl_loss,
        "attention_loss": att_loss,
        "feature_loss": feat_loss,
        "consistency_loss": cons_loss,
        "total_loss": total,
        "current_distill_weight": distill_w,
        "current_task_weight": task_w,
    }
    return total, loss_dict


if __name__ == "__main__":
    B, S, V, H, D = 2, 8, 128, 4, 32
    key = jax.random.PRNGKey(0)
    ks = jax.random.split(key, 8)

    # Model-side tensors in bf16 (kernel casts to f32 internally); labels/ids int32.
    student_logits = jax.random.normal(ks[0], (B, S, V), jnp.float32).astype(jnp.bfloat16)
    teacher_logits = jax.random.normal(ks[1], (B, S, V), jnp.float32).astype(jnp.bfloat16)
    labels = jax.random.randint(ks[2], (B, S), 0, V, jnp.int32)
    labels = labels.at[0, 0].set(IGNORE_INDEX).at[1, 3].set(IGNORE_INDEX)
    input_ids = jax.random.randint(ks[3], (B, S), 0, 20, jnp.int32)
    student_att = jax.random.normal(ks[4], (B, H, S, S), jnp.float32).astype(jnp.bfloat16)
    teacher_att = jax.random.normal(ks[5], (B, H, S, S), jnp.float32).astype(jnp.bfloat16)
    student_hid = jax.random.normal(ks[6], (B, S, D), jnp.float32).astype(jnp.bfloat16)
    teacher_hid = jax.random.normal(ks[7], (B, S, D), jnp.float32).astype(jnp.bfloat16)

    # deterministic parameter init: nn.Parameter([distill, task, attn, feat])
    adaptive_weights = jnp.array(
        [DISTILLATION_WEIGHT, TASK_WEIGHT, ATTENTION_WEIGHT, FEATURE_WEIGHT],
        dtype=jnp.float32)

    loss_fn = jax.jit(advanced_distillation_loss)
    total, loss_dict = loss_fn(student_logits, teacher_logits, labels, input_ids,
                               student_att, teacher_att, student_hid, teacher_hid,
                               adaptive_weights)
    jax.block_until_ready(total)
    print("KERNEL_OK")
</pallas_src>

<mosaic_0001>
module attributes {stable_mosaic.version = 11 : i64} {
  func.func @_logits_kernel(%arg0: i32, %arg1: i32, %arg2: memref<1x8x1xi32, #tpu.memory_space<vmem>>, %arg3: memref<1x8x1xi32, #tpu.memory_space<vmem>>, %arg4: memref<1x8x128xbf16, #tpu.memory_space<vmem>>, %arg5: memref<1x8x128xbf16, #tpu.memory_space<vmem>>, %arg6: memref<1x1x128xf32, #tpu.memory_space<vmem>>, %arg7: memref<1x1x128xf32, #tpu.memory_space<vmem>>, %arg8: memref<1x1x128xf32, #tpu.memory_space<vmem>>, %arg9: memref<1x128xf32, #tpu.memory_space<vmem>>) attributes {dimension_semantics = [#tpu.dimension_semantics<parallel>, #tpu.dimension_semantics<arbitrary>], iteration_bounds = array<i64: 2, 1>, scalar_prefetch = 0 : i64, scratch_operands = 1 : i64, tpu.core_type = #tpu.core_type<tc>, window_params = [{transform_indices = @transform_0, window_bounds = array<i64: 1, 8, 1>}, {transform_indices = @transform_1, window_bounds = array<i64: 1, 8, 1>}, {transform_indices = @transform_2, window_bounds = array<i64: 1, 8, 128>}, {transform_indices = @transform_3, window_bounds = array<i64: 1, 8, 128>}, {transform_indices = @transform_4, window_bounds = array<i64: 1, 1, 128>}, {transform_indices = @transform_5, window_bounds = array<i64: 1, 1, 128>}, {transform_indices = @transform_6, window_bounds = array<i64: 1, 1, 128>}]} {
    %c0_i32 = arith.constant 0 : i32
    %0 = arith.cmpi eq, %arg1, %c0_i32 : i32
    %1 = arith.extui %0 : i1 to i32
    %c0_i32_0 = arith.constant 0 : i32
    %2 = arith.cmpi ne, %1, %c0_i32_0 : i32
    scf.if %2 {
      %cst_54 = arith.constant 0.000000e+00 : f32
      %136 = vector.broadcast %cst_54 : f32 to vector<1x1x128xf32>
      %c0_55 = arith.constant 0 : index
      %c0_56 = arith.constant 0 : index
      %c0_57 = arith.constant 0 : index
      %137 = vector.load %arg6[%c0_55, %c0_56, %c0_57] : memref<1x1x128xf32, #tpu.memory_space<vmem>>, vector<1x1x128xf32>
      tpu.vector_store %arg6[%c0_55, %c0_56, %c0_57], %136 {strides = array<i32>} : memref<1x1x128xf32, #tpu.memory_space<vmem>>, vector<1x1x128xf32>,
      %cst_58 = arith.constant 0.000000e+00 : f32
      %138 = vector.broadcast %cst_58 : f32 to vector<1x1x128xf32>
      %c0_59 = arith.constant 0 : index
      %c0_60 = arith.constant 0 : index
      %c0_61 = arith.constant 0 : index
      %139 = vector.load %arg7[%c0_59, %c0_60, %c0_61] : memref<1x1x128xf32, #tpu.memory_space<vmem>>, vector<1x1x128xf32>
      tpu.vector_store %arg7[%c0_59, %c0_60, %c0_61], %138 {strides = array<i32>} : memref<1x1x128xf32, #tpu.memory_space<vmem>>, vector<1x1x128xf32>,
      %cst_62 = arith.constant 0.000000e+00 : f32
      %140 = vector.broadcast %cst_62 : f32 to vector<1x1x128xf32>
      %c0_63 = arith.constant 0 : index
      %c0_64 = arith.constant 0 : index
      %c0_65 = arith.constant 0 : index
      %141 = vector.load %arg8[%c0_63, %c0_64, %c0_65] : memref<1x1x128xf32, #tpu.memory_space<vmem>>, vector<1x1x128xf32>
      tpu.vector_store %arg8[%c0_63, %c0_64, %c0_65], %140 {strides = array<i32>} : memref<1x1x128xf32, #tpu.memory_space<vmem>>, vector<1x1x128xf32>,
    } else {
    }
    %c0 = arith.constant 0 : index
    %c0_1 = arith.constant 0 : index
    %c0_2 = arith.constant 0 : index
    %3 = vector.load %arg2[%c0, %c0_1, %c0_2] : memref<1x8x1xi32, #tpu.memory_space<vmem>>, vector<1x8x1xi32>
    %4 = vector.shape_cast %3 : vector<1x8x1xi32> to vector<8x1xi32>
    %c0_3 = arith.constant 0 : index
    %c0_4 = arith.constant 0 : index
    %c0_5 = arith.constant 0 : index
    %5 = vector.load %arg3[%c0_3, %c0_4, %c0_5] : memref<1x8x1xi32, #tpu.memory_space<vmem>>, vector<1x8x1xi32>
    %6 = vector.shape_cast %5 : vector<1x8x1xi32> to vector<8x1xi32>
    %c0_6 = arith.constant 0 : index
    %c0_7 = arith.constant 0 : index
    %c0_8 = arith.constant 0 : index
    %7 = vector.load %arg4[%c0_6, %c0_7, %c0_8] : memref<1x8x128xbf16, #tpu.memory_space<vmem>>, vector<1x8x128xbf16>
    %8 = vector.shape_cast %7 : vector<1x8x128xbf16> to vector<8x128xbf16>
    %9 = arith.extf %8 : vector<8x128xbf16> to vector<8x128xf32>
    %c0_9 = arith.constant 0 : index
    %c0_10 = arith.constant 0 : index
    %c0_11 = arith.constant 0 : index
    %10 = vector.load %arg5[%c0_9, %c0_10, %c0_11] : memref<1x8x128xbf16, #tpu.memory_space<vmem>>, vector<1x8x128xbf16>
    %11 = vector.shape_cast %10 : vector<1x8x128xbf16> to vector<8x128xbf16>
    %12 = arith.extf %11 : vector<8x128xbf16> to vector<8x128xf32>
    %c1_i32 = arith.constant 1 : i32
    %13 = vector.broadcast %c1_i32 : i32 to vector<8x1xi32>
    %14 = arith.cmpi sge, %6, %13 : vector<8x1xi32>
    %c5_i32 = arith.constant 5 : i32
    %15 = vector.broadcast %c5_i32 : i32 to vector<8x1xi32>
    %16 = arith.cmpi sle, %6, %15 : vector<8x1xi32>
    %17 = arith.andi %14, %16 : vector<8x1xi1>
    %c10_i32 = arith.constant 10 : i32
    %18 = vector.broadcast %c10_i32 : i32 to vector<8x1xi32>
    %19 = arith.cmpi sge, %6, %18 : vector<8x1xi32>
    %c14_i32 = arith.constant 14 : i32
    %20 = vector.broadcast %c14_i32 : i32 to vector<8x1xi32>
    %21 = arith.cmpi sle, %6, %20 : vector<8x1xi32>
    %22 = arith.andi %19, %21 : vector<8x1xi1>
    %23 = arith.ori %17, %22 : vector<8x1xi1>
    %cst = arith.constant 2.000000e+00 : f32
    %cst_12 = arith.constant 1.000000e+00 : f32
    %24 = vector.broadcast %cst : f32 to vector<8x1xf32>
    %25 = vector.broadcast %cst_12 : f32 to vector<8x1xf32>
    %26 = arith.select %23, %24, %25 : vector<8x1xi1>, vector<8x1xf32>
    %c-100_i32 = arith.constant -100 : i32
    %27 = vector.broadcast %c-100_i32 : i32 to vector<8x1xi32>
    %28 = arith.cmpi ne, %4, %27 : vector<8x1xi32>
    %29 = arith.extui %28 : vector<8x1xi1> to vector<8x1xi32>
    %30 = arith.sitofp %29 : vector<8x1xi32> to vector<8x1xf32>
    %cst_13 = arith.constant dense<0xFF800000> : vector<8xf32>
    %31 = vector.multi_reduction <maximumf>, %9, %cst_13 [1] : vector<8x128xf32> to vector<8xf32>
    %32 = vector.shape_cast %31 : vector<8xf32> to vector<8x1xf32>
    %c0_i32_14 = arith.constant 0 : i32
    %33 = vector.broadcast %c0_i32_14 : i32 to vector<8x1xi32>
    %34 = arith.select %28, %4, %33 : vector<8x1xi1>, vector<8x1xi32>
    %35 = tpu.iota {dimensions = array<i32: 1>} : vector<8x128xi32>
    %36 = vector.broadcast %34 : vector<8x1xi32> to vector<8x128xi32>
    %37 = arith.cmpi eq, %35, %36 : vector<8x128xi32>
    %cst_15 = arith.constant 0.000000e+00 : f32
    %38 = vector.broadcast %cst_15 : f32 to vector<8x128xf32>
    %39 = arith.select %37, %9, %38 : vector<8x128xi1>, vector<8x128xf32>
    %cst_16 = arith.constant dense<0.000000e+00> : vector<8xf32>
    %40 = vector.multi_reduction <add>, %39, %cst_16 [1] : vector<8x128xf32> to vector<8xf32>
    %41 = vector.shape_cast %40 : vector<8xf32> to vector<8x1xf32>
    %42 = vector.broadcast %32 : vector<8x1xf32> to vector<8x128xf32>
    %43 = arith.subf %9, %42 : vector<8x128xf32>
    %44 = math.exp %43 : vector<8x128xf32>
    %cst_17 = arith.constant dense<0.000000e+00> : vector<8xf32>
    %45 = vector.multi_reduction <add>, %44, %cst_17 [1] : vector<8x128xf32> to vector<8xf32>
    %46 = vector.shape_cast %45 : vector<8xf32> to vector<8x1xf32>
    %47 = math.log %46 : vector<8x1xf32>
    %48 = arith.addf %32, %47 : vector<8x1xf32>
    %49 = arith.subf %48, %41 : vector<8x1xf32>
    %c0_18 = arith.constant 0 : index
    %c0_19 = arith.constant 0 : index
    %c0_20 = arith.constant 0 : index
    %50 = vector.load %arg6[%c0_18, %c0_19, %c0_20] : memref<1x1x128xf32, #tpu.memory_space<vmem>>, vector<1x1x128xf32>
    %51 = arith.mulf %49, %26 : vector<8x1xf32>
    %52 = arith.mulf %51, %30 : vector<8x1xf32>
    %53 = vector.shape_cast %52 : vector<8x1xf32> to vector<1x8x1xf32>
    %cst_21 = arith.constant dense<0.000000e+00> : vector<1xf32>
    %54 = vector.multi_reduction <add>, %53, %cst_21 [1, 2] : vector<1x8x1xf32> to vector<1xf32>
    %55 = vector.shape_cast %54 : vector<1xf32> to vector<1x1x1xf32>
    %56 = vector.extract %55[0, 0, 0] : f32 from vector<1x1x1xf32>
    %57 = vector.broadcast %56 : f32 to vector<1x1x128xf32>
    %58 = arith.addf %50, %57 : vector<1x1x128xf32>
    %c0_22 = arith.constant 0 : index
    %c0_23 = arith.constant 0 : index
    %c0_24 = arith.constant 0 : index
    %59 = vector.load %arg6[%c0_22, %c0_23, %c0_24] : memref<1x1x128xf32, #tpu.memory_space<vmem>>, vector<1x1x128xf32>
    tpu.vector_store %arg6[%c0_22, %c0_23, %c0_24], %58 {strides = array<i32>} : memref<1x1x128xf32, #tpu.memory_space<vmem>>, vector<1x1x128xf32>,
    %cst_25 = arith.constant 2.500000e-01 : f32
    %60 = vector.broadcast %cst_25 : f32 to vector<8x128xf32>
    %61 = arith.mulf %9, %60 : vector<8x128xf32>
    %cst_26 = arith.constant 2.500000e-01 : f32
    %62 = vector.broadcast %cst_26 : f32 to vector<8x128xf32>
    %63 = arith.mulf %12, %62 : vector<8x128xf32>
    %cst_27 = arith.constant 2.500000e-01 : f32
    %64 = vector.broadcast %cst_27 : f32 to vector<8x1xf32>
    %65 = arith.mulf %32, %64 : vector<8x1xf32>
    %66 = vector.broadcast %65 : vector<8x1xf32> to vector<8x128xf32>
    %67 = arith.subf %61, %66 : vector<8x128xf32>
    %68 = math.exp %67 : vector<8x128xf32>
    %cst_28 = arith.constant dense<0.000000e+00> : vector<8xf32>
    %69 = vector.multi_reduction <add>, %68, %cst_28 [1] : vector<8x128xf32> to vector<8xf32>
    %70 = vector.shape_cast %69 : vector<8xf32> to vector<8x1xf32>
    %71 = math.log %70 : vector<8x1xf32>
    %72 = vector.broadcast %65 : vector<8x1xf32> to vector<8x128xf32>
    %73 = arith.subf %61, %72 : vector<8x128xf32>
    %74 = vector.broadcast %71 : vector<8x1xf32> to vector<8x128xf32>
    %75 = arith.subf %73, %74 : vector<8x128xf32>
    %cst_29 = arith.constant dense<0xFF800000> : vector<8xf32>
    %76 = vector.multi_reduction <maximumf>, %63, %cst_29 [1] : vector<8x128xf32> to vector<8xf32>
    %77 = vector.shape_cast %76 : vector<8xf32> to vector<8x1xf32>
    %78 = vector.broadcast %77 : vector<8x1xf32> to vector<8x128xf32>
    %79 = arith.subf %63, %78 : vector<8x128xf32>
    %80 = math.exp %79 : vector<8x128xf32>
    %cst_30 = arith.constant dense<0.000000e+00> : vector<8xf32>
    %81 = vector.multi_reduction <add>, %80, %cst_30 [1] : vector<8x128xf32> to vector<8xf32>
    %82 = vector.shape_cast %81 : vector<8xf32> to vector<8x1xf32>
    %83 = tpu.reciprocal %82 {approx = true} : vector<8x1xf32> -> vector<8x1xf32>
    %84 = vector.broadcast %83 : vector<8x1xf32> to vector<8x128xf32>
    %85 = arith.mulf %80, %84 : vector<8x128xf32>
    %86 = vector.broadcast %77 : vector<8x1xf32> to vector<8x128xf32>
    %87 = arith.subf %63, %86 : vector<8x128xf32>
    %88 = math.log %82 : vector<8x1xf32>
    %89 = vector.broadcast %88 : vector<8x1xf32> to vector<8x128xf32>
    %90 = arith.subf %87, %89 : vector<8x128xf32>
    %c0_31 = arith.constant 0 : index
    %c0_32 = arith.constant 0 : index
    %c0_33 = arith.constant 0 : index
    %91 = vector.load %arg7[%c0_31, %c0_32, %c0_33] : memref<1x1x128xf32, #tpu.memory_space<vmem>>, vector<1x1x128xf32>
    %92 = arith.subf %90, %75 : vector<8x128xf32>
    %93 = arith.mulf %85, %92 : vector<8x128xf32>
    %94 = vector.shape_cast %93 : vector<8x128xf32> to vector<1x8x128xf32>
    %cst_34 = arith.constant dense<0.000000e+00> : vector<1xf32>
    %95 = vector.multi_reduction <add>, %94, %cst_34 [1, 2] : vector<1x8x128xf32> to vector<1xf32>
    %96 = vector.shape_cast %95 : vector<1xf32> to vector<1x1x1xf32>
    %97 = vector.extract %96[0, 0, 0] : f32 from vector<1x1x1xf32>
    %98 = vector.broadcast %97 : f32 to vector<1x1x128xf32>
    %99 = arith.addf %91, %98 : vector<1x1x128xf32>
    %c0_35 = arith.constant 0 : index
    %c0_36 = arith.constant 0 : index
    %c0_37 = arith.constant 0 : index
    %100 = vector.load %arg7[%c0_35, %c0_36, %c0_37] : memref<1x1x128xf32, #tpu.memory_space<vmem>>, vector<1x1x128xf32>
    tpu.vector_store %arg7[%c0_35, %c0_36, %c0_37], %99 {strides = array<i32>} : memref<1x1x128xf32, #tpu.memory_space<vmem>>, vector<1x1x128xf32>,
    %101 = vector.extract_strided_slice %9 {offsets = [1, 0], sizes = [7, 128], strides = [1, 1]} : vector<8x128xf32> to vector<7x128xf32>
    %102 = vector.extract_strided_slice %9 {offsets = [0, 0], sizes = [1, 128], strides = [1, 1]} : vector<8x128xf32> to vector<1x128xf32>
    %103 = tpu.concatenate %101, %102 in 0 : vector<7x128xf32>, vector<1x128xf32> -> vector<8x128xf32>
    %104 = arith.subf %103, %9 : vector<8x128xf32>
    %105 = arith.mulf %104, %104 : vector<8x128xf32>
    %cst_38 = arith.constant dense<0.000000e+00> : vector<8xf32>
    %106 = vector.multi_reduction <add>, %105, %cst_38 [1] : vector<8x128xf32> to vector<8xf32>
    %107 = vector.shape_cast %106 : vector<8xf32> to vector<8x1xf32>
    %108 = math.sqrt %107 : vector<8x1xf32>
    %109 = tpu.iota {dimensions = array<i32: 0>} : vector<8x1xi32>
    %c7_i32 = arith.constant 7 : i32
    %110 = vector.broadcast %c7_i32 : i32 to vector<8x1xi32>
    %111 = arith.cmpi slt, %109, %110 : vector<8x1xi32>
    %cst_39 = arith.constant 0.000000e+00 : f32
    %112 = vector.broadcast %cst_39 : f32 to vector<8x1xf32>
    %113 = arith.select %111, %108, %112 : vector<8x1xi1>, vector<8x1xf32>
    %114 = vector.shape_cast %113 : vector<8x1xf32> to vector<1x8x1xf32>
    %cst_40 = arith.constant dense<0.000000e+00> : vector<1xf32>
    %115 = vector.multi_reduction <add>, %114, %cst_40 [1, 2] : vector<1x8x1xf32> to vector<1xf32>
    %116 = vector.shape_cast %115 : vector<1xf32> to vector<1x1x1xf32>
    %117 = vector.extract %116[0, 0, 0] : f32 from vector<1x1x1xf32>
    %118 = vector.extract_strided_slice %9 {offsets = [0, 0], sizes = [1, 128], strides = [1, 1]} : vector<8x128xf32> to vector<1x128xf32>
    %c0_41 = arith.constant 0 : index
    %c0_42 = arith.constant 0 : index
    %119 = vector.load %arg9[%c0_41, %c0_42] : memref<1x128xf32, #tpu.memory_space<vmem>>, vector<1x128xf32>
    %120 = arith.subf %118, %119 : vector<1x128xf32>
    %121 = arith.mulf %120, %120 : vector<1x128xf32>
    %122 = vector.shape_cast %121 : vector<1x128xf32> to vector<1x1x128xf32>
    %cst_43 = arith.constant dense<0.000000e+00> : vector<1xf32>
    %123 = vector.multi_reduction <add>, %122, %cst_43 [1, 2] : vector<1x1x128xf32> to vector<1xf32>
    %124 = vector.shape_cast %123 : vector<1xf32> to vector<1x1x1xf32>
    %125 = vector.extract %124[0, 0, 0] : f32 from vector<1x1x1xf32>
    %126 = math.sqrt %125 : f32
    %c0_44 = arith.constant 0 : index
    %c0_45 = arith.constant 0 : index
    %c0_46 = arith.constant 0 : index
    %127 = vector.load %arg8[%c0_44, %c0_45, %c0_46] : memref<1x1x128xf32, #tpu.memory_space<vmem>>, vector<1x1x128xf32>
    %c0_i32_47 = arith.constant 0 : i32
    %128 = arith.cmpi sgt, %arg1, %c0_i32_47 : i32
    %cst_48 = arith.constant 0.000000e+00 : f32
    %129 = arith.select %128, %126, %cst_48 : f32
    %130 = arith.addf %117, %129 : f32
    %131 = vector.broadcast %130 : f32 to vector<1x1x128xf32>
    %132 = arith.addf %127, %131 : vector<1x1x128xf32>
    %c0_49 = arith.constant 0 : index
    %c0_50 = arith.constant 0 : index
    %c0_51 = arith.constant 0 : index
    %133 = vector.load %arg8[%c0_49, %c0_50, %c0_51] : memref<1x1x128xf32, #tpu.memory_space<vmem>>, vector<1x1x128xf32>
    tpu.vector_store %arg8[%c0_49, %c0_50, %c0_51], %132 {strides = array<i32>} : memref<1x1x128xf32, #tpu.memory_space<vmem>>, vector<1x1x128xf32>,
    %134 = vector.extract_strided_slice %9 {offsets = [7, 0], sizes = [1, 128], strides = [1, 1]} : vector<8x128xf32> to vector<1x128xf32>
    %c0_52 = arith.constant 0 : index
    %c0_53 = arith.constant 0 : index
    %135 = vector.load %arg9[%c0_52, %c0_53] : memref<1x128xf32, #tpu.memory_space<vmem>>, vector<1x128xf32>
    tpu.vector_store %arg9[%c0_52, %c0_53], %134 {strides = array<i32>} : memref<1x128xf32, #tpu.memory_space<vmem>>, vector<1x128xf32>,
    return
  }
  func.func @transform_0(%arg0: i32, %arg1: i32) -> (i32, i32, i32) {
    %c0_i32 = arith.constant 0 : i32
    %c0_i32_0 = arith.constant 0 : i32
    return %arg0, %arg1, %c0_i32 : i32, i32, i32
  }
  func.func @transform_1(%arg0: i32, %arg1: i32) -> (i32, i32, i32) {
    %c0_i32 = arith.constant 0 : i32
    %c0_i32_0 = arith.constant 0 : i32
    return %arg0, %arg1, %c0_i32 : i32, i32, i32
  }
  func.func @transform_2(%arg0: i32, %arg1: i32) -> (i32, i32, i32) {
    %c0_i32 = arith.constant 0 : i32
    %c0_i32_0 = arith.constant 0 : i32
    return %arg0, %arg1, %c0_i32 : i32, i32, i32
  }
  func.func @transform_3(%arg0: i32, %arg1: i32) -> (i32, i32, i32) {
    %c0_i32 = arith.constant 0 : i32
    %c0_i32_0 = arith.constant 0 : i32
    return %arg0, %arg1, %c0_i32 : i32, i32, i32
  }
  func.func @transform_4(%arg0: i32, %arg1: i32) -> (i32, i32, i32) {
    %c0_i32 = arith.constant 0 : i32
    %c0_i32_0 = arith.constant 0 : i32
    %c0_i32_1 = arith.constant 0 : i32
    return %arg0, %c0_i32, %c0_i32_0 : i32, i32, i32
  }
  func.func @transform_5(%arg0: i32, %arg1: i32) -> (i32, i32, i32) {
    %c0_i32 = arith.constant 0 : i32
    %c0_i32_0 = arith.constant 0 : i32
    %c0_i32_1 = arith.constant 0 : i32
    return %arg0, %c0_i32, %c0_i32_0 : i32, i32, i32
  }
  func.func @transform_6(%arg0: i32, %arg1: i32) -> (i32, i32, i32) {
    %c0_i32 = arith.constant 0 : i32
    %c0_i32_0 = arith.constant 0 : i32
    %c0_i32_1 = arith.constant 0 : i32
    return %arg0, %c0_i32, %c0_i32_0 : i32, i32, i32
  }
}

module attributes {stable_mosaic.version = 11 : i64} {
  func.func @_attn_kernel(%arg0: i32, %arg1: i32, %arg2: i32, %arg3: memref<1x1x8x8xbf16, #tpu.memory_space<vmem>>, %arg4: memref<1x1x8x8xbf16, #tpu.memory_space<vmem>>, %arg5: memref<1x1x128xf32, #tpu.memory_space<vmem>>, %arg6: memref<8x8xf32, #tpu.memory_space<vmem>>) attributes {dimension_semantics = [#tpu.dimension_semantics<parallel>, #tpu.dimension_semantics<arbitrary>, #tpu.dimension_semantics<arbitrary>], iteration_bounds = array<i64: 2, 1, 4>, scalar_prefetch = 0 : i64, scratch_operands = 1 : i64, tpu.core_type = #tpu.core_type<tc>, window_params = [{transform_indices = @transform_0, window_bounds = array<i64: 1, 1, 8, 8>}, {transform_indices = @transform_1, window_bounds = array<i64: 1, 1, 8, 8>}, {transform_indices = @transform_2, window_bounds = array<i64: 1, 1, 128>}]} {
    %c0_i32 = arith.constant 0 : i32
    %0 = arith.cmpi eq, %arg1, %c0_i32 : i32
    %c0_i32_0 = arith.constant 0 : i32
    %1 = arith.cmpi eq, %arg2, %c0_i32_0 : i32
    %2 = arith.andi %0, %1 : i1
    %3 = arith.extui %2 : i1 to i32
    %c0_i32_1 = arith.constant 0 : i32
    %4 = arith.cmpi ne, %3, %c0_i32_1 : i32
    scf.if %4 {
      %cst = arith.constant 0.000000e+00 : f32
      %21 = vector.broadcast %cst : f32 to vector<1x1x128xf32>
      %c0_16 = arith.constant 0 : index
      %c0_17 = arith.constant 0 : index
      %c0_18 = arith.constant 0 : index
      %22 = vector.load %arg5[%c0_16, %c0_17, %c0_18] : memref<1x1x128xf32, #tpu.memory_space<vmem>>, vector<1x1x128xf32>
      tpu.vector_store %arg5[%c0_16, %c0_17, %c0_18], %21 {strides = array<i32>} : memref<1x1x128xf32, #tpu.memory_space<vmem>>, vector<1x1x128xf32>,
    } else {
    }
    %c0_i32_2 = arith.constant 0 : i32
    %5 = arith.cmpi eq, %arg2, %c0_i32_2 : i32
    %6 = arith.extui %5 : i1 to i32
    %c0_i32_3 = arith.constant 0 : i32
    %7 = arith.cmpi ne, %6, %c0_i32_3 : i32
    scf.if %7 {
      %cst = arith.constant 0.000000e+00 : f32
      %21 = vector.broadcast %cst : f32 to vector<8x8xf32>
      %c0_16 = arith.constant 0 : index
      %c0_17 = arith.constant 0 : index
      %22 = vector.load %arg6[%c0_16, %c0_17] : memref<8x8xf32, #tpu.memory_space<vmem>>, vector<8x8xf32>
      tpu.vector_store %arg6[%c0_16, %c0_17], %21 {strides = array<i32>} : memref<8x8xf32, #tpu.memory_space<vmem>>, vector<8x8xf32>,
    } else {
    }
    %c0 = arith.constant 0 : index
    %c0_4 = arith.constant 0 : index
    %8 = vector.load %arg6[%c0, %c0_4] : memref<8x8xf32, #tpu.memory_space<vmem>>, vector<8x8xf32>
    %c0_5 = arith.constant 0 : index
    %c0_6 = arith.constant 0 : index
    %c0_7 = arith.constant 0 : index
    %c0_8 = arith.constant 0 : index
    %9 = vector.load %arg3[%c0_5, %c0_6, %c0_7, %c0_8] : memref<1x1x8x8xbf16, #tpu.memory_space<vmem>>, vector<1x1x8x8xbf16>
    %10 = vector.shape_cast %9 : vector<1x1x8x8xbf16> to vector<8x8xbf16>
    %11 = arith.extf %10 : vector<8x8xbf16> to vector<8x8xf32>
    %c0_9 = arith.constant 0 : index
    %c0_10 = arith.constant 0 : index
    %c0_11 = arith.constant 0 : index
    %c0_12 = arith.constant 0 : index
    %12 = vector.load %arg4[%c0_9, %c0_10, %c0_11, %c0_12] : memref<1x1x8x8xbf16, #tpu.memory_space<vmem>>, vector<1x1x8x8xbf16>
    %13 = vector.shape_cast %12 : vector<1x1x8x8xbf16> to vector<8x8xbf16>
    %14 = arith.extf %13 : vector<8x8xbf16> to vector<8x8xf32>
    %15 = arith.subf %11, %14 : vector<8x8xf32>
    %16 = arith.addf %8, %15 : vector<8x8xf32>
    %c0_13 = arith.constant 0 : index
    %c0_14 = arith.constant 0 : index
    %17 = vector.load %arg6[%c0_13, %c0_14] : memref<8x8xf32, #tpu.memory_space<vmem>>, vector<8x8xf32>
    tpu.vector_store %arg6[%c0_13, %c0_14], %16 {strides = array<i32>} : memref<8x8xf32, #tpu.memory_space<vmem>>, vector<8x8xf32>,
    %c3_i32 = arith.constant 3 : i32
    %18 = arith.cmpi eq, %arg2, %c3_i32 : i32
    %19 = arith.extui %18 : i1 to i32
    %c0_i32_15 = arith.constant 0 : i32
    %20 = arith.cmpi ne, %19, %c0_i32_15 : i32
    scf.if %20 {
      %c0_16 = arith.constant 0 : index
      %c0_17 = arith.constant 0 : index
      %21 = vector.load %arg6[%c0_16, %c0_17] : memref<8x8xf32, #tpu.memory_space<vmem>>, vector<8x8xf32>
      %cst = arith.constant 2.500000e-01 : f32
      %22 = vector.broadcast %cst : f32 to vector<8x8xf32>
      %23 = arith.mulf %21, %22 : vector<8x8xf32>
      %c0_18 = arith.constant 0 : index
      %c0_19 = arith.constant 0 : index
      %c0_20 = arith.constant 0 : index
      %24 = vector.load %arg5[%c0_18, %c0_19, %c0_20] : memref<1x1x128xf32, #tpu.memory_space<vmem>>, vector<1x1x128xf32>
      %25 = arith.mulf %23, %23 : vector<8x8xf32>
      %26 = vector.shape_cast %25 : vector<8x8xf32> to vector<1x8x8xf32>
      %cst_21 = arith.constant dense<0.000000e+00> : vector<1xf32>
      %27 = vector.multi_reduction <add>, %26, %cst_21 [1, 2] : vector<1x8x8xf32> to vector<1xf32>
      %28 = vector.shape_cast %27 : vector<1xf32> to vector<1x1x1xf32>
      %29 = vector.extract %28[0, 0, 0] : f32 from vector<1x1x1xf32>
      %30 = vector.broadcast %29 : f32 to vector<1x1x128xf32>
      %31 = arith.addf %24, %30 : vector<1x1x128xf32>
      %c0_22 = arith.constant 0 : index
      %c0_23 = arith.constant 0 : index
      %c0_24 = arith.constant 0 : index
      %32 = vector.load %arg5[%c0_22, %c0_23, %c0_24] : memref<1x1x128xf32, #tpu.memory_space<vmem>>, vector<1x1x128xf32>
      tpu.vector_store %arg5[%c0_22, %c0_23, %c0_24], %31 {strides = array<i32>} : memref<1x1x128xf32, #tpu.memory_space<vmem>>, vector<1x1x128xf32>,
    } else {
    }
    return
  }
  func.func @transform_0(%arg0: i32, %arg1: i32, %arg2: i32) -> (i32, i32, i32, i32) {
    %c0_i32 = arith.constant 0 : i32
    %c0_i32_0 = arith.constant 0 : i32
    return %arg0, %arg2, %arg1, %c0_i32 : i32, i32, i32, i32
  }
  func.func @transform_1(%arg0: i32, %arg1: i32, %arg2: i32) -> (i32, i32, i32, i32) {
    %c0_i32 = arith.constant 0 : i32
    %c0_i32_0 = arith.constant 0 : i32
    return %arg0, %arg2, %arg1, %c0_i32 : i32, i32, i32, i32
  }
  func.func @transform_2(%arg0: i32, %arg1: i32, %arg2: i32) -> (i32, i32, i32) {
    %c0_i32 = arith.constant 0 : i32
    %c0_i32_0 = arith.constant 0 : i32
    %c0_i32_1 = arith.constant 0 : i32
    return %arg0, %c0_i32, %c0_i32_0 : i32, i32, i32
  }
}

</mosaic_0001>

<llo_original>
// kernel: advanced_distillation_loss.2
$region0: #{advanced_distillation_loss.2}
  #allocation0 [shape = 'u32[]', space=smem, size = 0x4, offset = 0x4, fixed_abs, tag = 'smem constant byte address 0x4 - core index']
  #allocation1 [shape = 'u32[144,128]{1,0:T(1,128)}', space=vmem, size = 0x12000, scoped, tag = 'internal scratch']
  #allocation2 [shape = 'f32[1,128]{1,0:T(1,128)}', space=vmem, size = 0x200, scoped, tag = 'scratch operand']
  %s0 = inlined_call_operand.vmem [shape: s32[2,8,1], index: 0, kind: input, shape index: {}]
  %s1 = inlined_call_operand.vmem [shape: s32[2,8,1], index: 1, kind: input, shape index: {}]
  %s2 = inlined_call_operand.vmem [shape: bf16[2,8,128], index: 2, kind: input, shape index: {}]
  %s3 = inlined_call_operand.vmem [shape: bf16[2,8,128], index: 3, kind: input, shape index: {}]
  %s4 = inlined_call_operand.vmem [shape: f32[2,1,128], index: 4, kind: output, shape index: {0}]
  %s5 = inlined_call_operand.vmem [shape: f32[2,1,128], index: 5, kind: output, shape index: {1}]
  %s6 = inlined_call_operand.vmem [shape: f32[2,1,128], index: 6, kind: output, shape index: {2}]
  %7 = xla_tuple %s4, %s5, %s6
  %s8 = sld [smem:[#allocation0]]
  $region69: #{advanced_distillation_loss.2} parent=0
    _
  %s10 = ssub.s32 1, %s8
  %s11 = scalar_select 0, %s10, %s8
  loop: start=0, step=1, limit=4
  $region2: #{advanced_distillation_loss.2} parent=0 // loop_pre_header
    _
  $region3: #{advanced_distillation_loss.2} parent=0 // loop_header
    %s13 = sphi 0, %s17
    %p14 = scmp.ge.s32.totalorder %s13, 4
    %s20 = sphi 0, %s32
    %s21 = sphi 0, %s28
    %s22 = sphi 0, %s20
    %s23 = sphi 0, %s21
    %s24 = sphi 0, %s22
    %s25 = sphi 0, %s23
    %s37 = sphi 0, %s39
    %s40 = sphi 0, %s37
    %s41 = sphi 0, %s40
    %s57 = sphi 0, %s41
    %s65 = sphi 0, %s67
    %s68 = sphi 0, %s65
    %s69 = sphi 0, %s68
    %s85 = sphi 0, %s69
    %s93 = sphi 0, %s95
    %s96 = sphi 0, %s93
    %s97 = sphi 0, %s96
    %s113 = sphi 0, %s97
    %s121 = sphi 0, %s123
    %s124 = sphi 0, %s121
    %s125 = sphi 0, %s124
    %s141 = sphi 0, %s125
    %s147 = sphi 0, %s149
    %s150 = sphi 0, %s147
    %s151 = sphi 0, %s150
    %s167 = sphi 0, %s151
    %s173 = sphi 0, %s175
    %s176 = sphi 0, %s173
    %s177 = sphi 0, %s176
    %s193 = sphi 0, %s177
    %s199 = sphi 0, %s201
    %s202 = sphi 0, %s199
    %s203 = sphi 0, %s202
    %s219 = sphi 0, %s203
  $region4: #{advanced_distillation_loss.2} parent=0 // loop_header_branch
    %16 = sbr.rel (%p14) target = $region8
  $region5: #{advanced_distillation_loss.2} parent=0 // loop_body
    %s18 = ssub.s32 %s13, 1
    %s19 = ssub.s32 %s13, 2
    %s26 = sadd.s32 1, %s21
    %p27 = scmp.ge.s32.totalorder %s26, 1
    %s28 = scalar_select %p27, 0, %s26
    %s29 = sadd.s32 1, %s20
    %s30 = scalar_select %p27, %s29, %s20
    %p31 = scmp.ge.s32.totalorder %s30, 2
    %s32 = scalar_select %p31, 0, %s30
    %s33 = ssub.s32 %s20, %s32
    %s34 = ssub.s32 %s21, %s28
    %s35 = sor.u32 %s33, %s34
    %p36 = scmp.eq.s32.totalorder %s35, 0
    %s38 = sadd.s32 %s37, 1
    %s39 = scalar_select %p36, %s37, %s38
    %p42 = pneg %p36
    %p43 = scmp.eq.s32.totalorder %s13, 1
    %p44 = por %p42, %p43
    %p45 = scmp.ne.s32.totalorder %s37, %s40
    %p46 = scmp.eq.s32.totalorder %s13, 0
    %p47 = por %p45, %p46
    %p48 = scmp.ne.s32.totalorder %s37, %s40
    %p49 = scmp.eq.s32.totalorder %s18, 1
    %p50 = por %p48, %p49
    %p51 = scmp.ne.s32.totalorder %s40, %s41
    %p52 = scmp.eq.s32.totalorder %s18, 0
    %p53 = por %p51, %p52
    %p54 = scmp.ne.s32.totalorder %s40, %s41
    %p55 = scmp.eq.s32.totalorder %s19, 1
    %p56 = por %p54, %p55
    %p58 = scmp.ne.s32.totalorder %s41, %s57
    %p59 = scmp.eq.s32.totalorder %s19, 0
    %p60 = por %p58, %p59
    %s61 = ssub.s32 %s20, %s32
    %s62 = ssub.s32 %s21, %s28
    %s63 = sor.u32 %s61, %s62
    %p64 = scmp.eq.s32.totalorder %s63, 0
    %s66 = sadd.s32 %s65, 1
    %s67 = scalar_select %p64, %s65, %s66
    %p70 = pneg %p64
    %p71 = scmp.eq.s32.totalorder %s13, 1
    %p72 = por %p70, %p71
    %p73 = scmp.ne.s32.totalorder %s65, %s68
    %p74 = scmp.eq.s32.totalorder %s13, 0
    %p75 = por %p73, %p74
    %p76 = scmp.ne.s32.totalorder %s65, %s68
    %p77 = scmp.eq.s32.totalorder %s18, 1
    %p78 = por %p76, %p77
    %p79 = scmp.ne.s32.totalorder %s68, %s69
    %p80 = scmp.eq.s32.totalorder %s18, 0
    %p81 = por %p79, %p80
    %p82 = scmp.ne.s32.totalorder %s68, %s69
    %p83 = scmp.eq.s32.totalorder %s19, 1
    %p84 = por %p82, %p83
    %p86 = scmp.ne.s32.totalorder %s69, %s85
    %p87 = scmp.eq.s32.totalorder %s19, 0
    %p88 = por %p86, %p87
    %s89 = ssub.s32 %s20, %s32
    %s90 = ssub.s32 %s21, %s28
    %s91 = sor.u32 %s89, %s90
    %p92 = scmp.eq.s32.totalorder %s91, 0
    %s94 = sadd.s32 %s93, 1
    %s95 = scalar_select %p92, %s93, %s94
    %p98 = pneg %p92
    %p99 = scmp.eq.s32.totalorder %s13, 1
    %p100 = por %p98, %p99
    %p101 = scmp.ne.s32.totalorder %s93, %s96
    %p102 = scmp.eq.s32.totalorder %s13, 0
    %p103 = por %p101, %p102
    %p104 = scmp.ne.s32.totalorder %s93, %s96
    %p105 = scmp.eq.s32.totalorder %s18, 1
    %p106 = por %p104, %p105
    %p107 = scmp.ne.s32.totalorder %s96, %s97
    %p108 = scmp.eq.s32.totalorder %s18, 0
    %p109 = por %p107, %p108
    %p110 = scmp.ne.s32.totalorder %s96, %s97
    %p111 = scmp.eq.s32.totalorder %s19, 1
    %p112 = por %p110, %p111
    %p114 = scmp.ne.s32.totalorder %s97, %s113
    %p115 = scmp.eq.s32.totalorder %s19, 0
    %p116 = por %p114, %p115
    %s117 = ssub.s32 %s20, %s32
    %s118 = ssub.s32 %s21, %s28
    %s119 = sor.u32 %s117, %s118
    %p120 = scmp.eq.s32.totalorder %s119, 0
    %s122 = sadd.s32 %s121, 1
    %s123 = scalar_select %p120, %s121, %s122
    %p126 = pneg %p120
    %p127 = scmp.eq.s32.totalorder %s13, 1
    %p128 = por %p126, %p127
    %p129 = scmp.ne.s32.totalorder %s121, %s124
    %p130 = scmp.eq.s32.totalorder %s13, 0
    %p131 = por %p129, %p130
    %p132 = scmp.ne.s32.totalorder %s121, %s124
    %p133 = scmp.eq.s32.totalorder %s18, 1
    %p134 = por %p132, %p133
    %p135 = scmp.ne.s32.totalorder %s124, %s125
    %p136 = scmp.eq.s32.totalorder %s18, 0
    %p137 = por %p135, %p136
    %p138 = scmp.ne.s32.totalorder %s124, %s125
    %p139 = scmp.eq.s32.totalorder %s19, 1
    %p140 = por %p138, %p139
    %p142 = scmp.ne.s32.totalorder %s125, %s141
    %p143 = scmp.eq.s32.totalorder %s19, 0
    %p144 = por %p142, %p143
    %s145 = ssub.s32 %s20, %s32
    %p146 = scmp.eq.s32.totalorder %s145, 0
    %s148 = sadd.s32 %s147, 1
    %s149 = scalar_select %p146, %s147, %s148
    %p152 = pneg %p146
    %p153 = scmp.eq.s32.totalorder %s13, 1
    %p154 = por %p152, %p153
    %p155 = scmp.ne.s32.totalorder %s147, %s150
    %p156 = scmp.eq.s32.totalorder %s13, 0
    %p157 = por %p155, %p156
    %p158 = scmp.ne.s32.totalorder %s147, %s150
    %p159 = scmp.eq.s32.totalorder %s18, 1
    %p160 = por %p158, %p159
    %p161 = scmp.ne.s32.totalorder %s150, %s151
    %p162 = scmp.eq.s32.totalorder %s18, 0
    %p163 = por %p161, %p162
    %p164 = scmp.ne.s32.totalorder %s150, %s151
    %p165 = scmp.eq.s32.totalorder %s19, 1
    %p166 = por %p164, %p165
    %p168 = scmp.ne.s32.totalorder %s151, %s167
    %p169 = scmp.eq.s32.totalorder %s19, 0
    %p170 = por %p168, %p169
    %s171 = ssub.s32 %s20, %s32
    %p172 = scmp.eq.s32.totalorder %s171, 0
    %s174 = sadd.s32 %s173, 1
    %s175 = scalar_select %p172, %s173, %s174
    %p178 = pneg %p172
    %p179 = scmp.eq.s32.totalorder %s13, 1
    %p180 = por %p178, %p179
    %p181 = scmp.ne.s32.totalorder %s173, %s176
    %p182 = scmp.eq.s32.totalorder %s13, 0
    %p183 = por %p181, %p182
    %p184 = scmp.ne.s32.totalorder %s173, %s176
    %p185 = scmp.eq.s32.totalorder %s18, 1
    %p186 = por %p184, %p185
    %p187 = scmp.ne.s32.totalorder %s176, %s177
    %p188 = scmp.eq.s32.totalorder %s18, 0
    %p189 = por %p187, %p188
    %p190 = scmp.ne.s32.totalorder %s176, %s177
    %p191 = scmp.eq.s32.totalorder %s19, 1
    %p192 = por %p190, %p191
    %p194 = scmp.ne.s32.totalorder %s177, %s193
    %p195 = scmp.eq.s32.totalorder %s19, 0
    %p196 = por %p194, %p195
    %s197 = ssub.s32 %s20, %s32
    %p198 = scmp.eq.s32.totalorder %s197, 0
    %s200 = sadd.s32 %s199, 1
    %s201 = scalar_select %p198, %s199, %s200
    %p204 = pneg %p198
    %p205 = scmp.eq.s32.totalorder %s13, 1
    %p206 = por %p204, %p205
    %p207 = scmp.ne.s32.totalorder %s199, %s202
    %p208 = scmp.eq.s32.totalorder %s13, 0
    %p209 = por %p207, %p208
    %p210 = scmp.ne.s32.totalorder %s199, %s202
    %p211 = scmp.eq.s32.totalorder %s18, 1
    %p212 = por %p210, %p211
    %p213 = scmp.ne.s32.totalorder %s202, %s203
    %p214 = scmp.eq.s32.totalorder %s18, 0
    %p215 = por %p213, %p214
    %p216 = scmp.ne.s32.totalorder %s202, %s203
    %p217 = scmp.eq.s32.totalorder %s19, 1
    %p218 = por %p216, %p217
    %p220 = scmp.ne.s32.totalorder %s203, %s219
    %p221 = scmp.eq.s32.totalorder %s19, 0
    %p222 = por %p220, %p221
    %p223 = scmp.le.s32.totalorder 1, %s13
    %p224 = scmp.lt.s32.totalorder %s13, 3
    %p225 = pnand %p223, %p224
    %p226 = pneg %p225
    // Predicated region
    $region9: #{advanced_distillation_loss.2} parent=5 // pred_check
      _
    $region10: #{advanced_distillation_loss.2} parent=5 // pred_check_branch
      %228 = sbr.rel (%p225) target = $region12
    $region11: #{advanced_distillation_loss.2} parent=5 // pred_region
      %s229 = ssub.s32 %s13, 1
    $region12: #{advanced_distillation_loss.2} parent=5 // pred_fallthru
      _
    %p230 = scmp.lt.s32.totalorder %s13, 2
    // Predicated region
    $region13: #{advanced_distillation_loss.2} parent=5 // pred_check
      %p231 = pneg %p230
    $region14: #{advanced_distillation_loss.2} parent=5 // pred_check_branch
      %233 = sbr.rel (%p231) target = $region16
    $region15: #{advanced_distillation_loss.2} parent=5 // pred_region
      // Predicated region
      $region17: #{advanced_distillation_loss.2} parent=15 // pred_check
        %p234 = pneg %p47
      $region18: #{advanced_distillation_loss.2} parent=15 // pred_check_branch
        %236 = sbr.rel (%p234) target = $region20
      $region19: #{advanced_distillation_loss.2} parent=15 // pred_region
        %p237 = scmp.lt.s32.totalorder %s20, 1
        %s238 = scalar_select %p237, %s20, 1
        %p239 = scmp.lt.s32.totalorder %s21, 0
        %s240 = scalar_select %p239, %s21, 0
        %s241 = sadd.s32 %s240, %s238
        %s242 = smul.addr %s241, 8
        %s243 = scalar_lea.vmem %s0, %s242
      $region20: #{advanced_distillation_loss.2} parent=15 // pred_fallthru
        _
      // Predicated region
      $region21: #{advanced_distillation_loss.2} parent=15 // pred_check
        %p244 = pneg %p75
      $region22: #{advanced_distillation_loss.2} parent=15 // pred_check_branch
        %246 = sbr.rel (%p244) target = $region24
      $region23: #{advanced_distillation_loss.2} parent=15 // pred_region
        %p247 = scmp.lt.s32.totalorder %s20, 1
        %s248 = scalar_select %p247, %s20, 1
        %p249 = scmp.lt.s32.totalorder %s21, 0
        %s250 = scalar_select %p249, %s21, 0
        %s251 = sadd.s32 %s250, %s248
        %s252 = smul.addr %s251, 8
        %s253 = scalar_lea.vmem %s1, %s252
      $region24: #{advanced_distillation_loss.2} parent=15 // pred_fallthru
        _
      // Predicated region
      $region25: #{advanced_distillation_loss.2} parent=15 // pred_check
        %p254 = pneg %p103
      $region26: #{advanced_distillation_loss.2} parent=15 // pred_check_branch
        %256 = sbr.rel (%p254) target = $region28
      $region27: #{advanced_distillation_loss.2} parent=15 // pred_region
        %p257 = scmp.lt.s32.totalorder %s20, 1
        %s258 = scalar_select %p257, %s20, 1
        %p259 = scmp.lt.s32.totalorder %s21, 0
        %s260 = scalar_select %p259, %s21, 0
        %s261 = sadd.s32 %s260, %s258
        %s262 = smul.addr %s261, 4
        %s263 = scalar_lea.vmem %s2, %s262
      $region28: #{advanced_distillation_loss.2} parent=15 // pred_fallthru
        _
      // Predicated region
      $region29: #{advanced_distillation_loss.2} parent=15 // pred_check
        %p264 = pneg %p131
      $region30: #{advanced_distillation_loss.2} parent=15 // pred_check_branch
        %266 = sbr.rel (%p264) target = $region32
      $region31: #{advanced_distillation_loss.2} parent=15 // pred_region
        %p267 = scmp.lt.s32.totalorder %s20, 1
        %s268 = scalar_select %p267, %s20, 1
        %p269 = scmp.lt.s32.totalorder %s21, 0
        %s270 = scalar_select %p269, %s21, 0
        %s271 = sadd.s32 %s270, %s268
        %s272 = smul.addr %s271, 4
        %s273 = scalar_lea.vmem %s3, %s272
      $region32: #{advanced_distillation_loss.2} parent=15 // pred_fallthru
        _
    $region16: #{advanced_distillation_loss.2} parent=5 // pred_fallthru
      _
    %p274 = scmp.le.s32.totalorder 1, %s13
    %p275 = scmp.lt.s32.totalorder %s13, 3
    %p276 = pnand %p274, %p275
    %p277 = pneg %p276
    // Predicated region
    $region33: #{advanced_distillation_loss.2} parent=5 // pred_check
      _
    $region34: #{advanced_distillation_loss.2} parent=5 // pred_check_branch
      %279 = sbr.rel (%p276) target = $region36
    $region35: #{advanced_distillation_loss.2} parent=5 // pred_region
      %s280 = ssub.s32 %s13, 1
      %p281 = scmp.lt.s32.totalorder %s22, 1
      %s282 = scalar_select %p281, %s22, 1
      %p283 = scmp.lt.s32.totalorder %s23, 0
      %s284 = scalar_select %p283, %s23, 0
      %s285 = sadd.s32 %s284, %s282
      %s286 = smul.addr %s285, 8
      %s287 = scalar_lea.vmem %s0, %s286
      %p288 = pneg %p53
      %p289 = pneg %p50
      %p290 = scmp.lt.s32.totalorder %s22, 1
      %s291 = scalar_select %p290, %s22, 1
      %p292 = scmp.lt.s32.totalorder %s23, 0
      %s293 = scalar_select %p292, %s23, 0
      %s294 = sadd.s32 %s293, %s291
      %s295 = smul.addr %s294, 8
      %s296 = scalar_lea.vmem %s1, %s295
      %p297 = pneg %p81
      %p298 = pneg %p78
      %p299 = scmp.lt.s32.totalorder %s22, 1
      %s300 = scalar_select %p299, %s22, 1
      %p301 = scmp.lt.s32.totalorder %s23, 0
      %s302 = scalar_select %p301, %s23, 0
      %s303 = sadd.s32 %s302, %s300
      %s304 = smul.addr %s303, 4
      %s305 = scalar_lea.vmem %s2, %s304
      %p306 = pneg %p109
      %p307 = pneg %p106
      %p308 = scmp.lt.s32.totalorder %s22, 1
      %s309 = scalar_select %p308, %s22, 1
      %p310 = scmp.lt.s32.totalorder %s23, 0
      %s311 = scalar_select %p310, %s23, 0
      %s312 = sadd.s32 %s311, %s309
      %s313 = smul.addr %s312, 4
      %s314 = scalar_lea.vmem %s3, %s313
      %p315 = pneg %p137
      %p316 = pneg %p134
      %p317 = pneg %p163
      %p318 = pneg %p160
      %p319 = scmp.lt.s32.totalorder %s22, 1
      %s320 = scalar_select %p319, %s22, 1
      %s321 = scalar_lea.vmem %s4, %s320
      %p322 = pneg %p189
      %p323 = pneg %p186
      %p324 = scmp.lt.s32.totalorder %s22, 1
      %s325 = scalar_select %p324, %s22, 1
      %s326 = scalar_lea.vmem %s5, %s325
      %p327 = pneg %p215
      %p328 = pneg %p212
      %p329 = scmp.lt.s32.totalorder %s22, 1
      %s330 = scalar_select %p329, %s22, 1
      %s331 = scalar_lea.vmem %s6, %s330
      %p332 = scmp.lt.s32.totalorder %s22, 1
      %s333 = scalar_select %p332, %s22, 1
      %p334 = scmp.lt.s32.totalorder %s23, 0
      %s335 = scalar_select %p334, %s23, 0
      %s336 = sadd.s32 %s335, %s333
      %s337 = smul.addr %s336, 8
      %s338 = scalar_lea.vmem %s0, %s337
      %p339 = scmp.lt.s32.totalorder %s22, 1
      %s340 = scalar_select %p339, %s22, 1
      %p341 = scmp.lt.s32.totalorder %s23, 0
      %s342 = scalar_select %p341, %s23, 0
      %s343 = sadd.s32 %s342, %s340
      %s344 = smul.addr %s343, 8
      %s345 = scalar_lea.vmem %s1, %s344
      %p346 = scmp.lt.s32.totalorder %s22, 1
      %s347 = scalar_select %p346, %s22, 1
      %p348 = scmp.lt.s32.totalorder %s23, 0
      %s349 = scalar_select %p348, %s23, 0
      %s350 = sadd.s32 %s349, %s347
      %s351 = smul.addr %s350, 4
      %s352 = scalar_lea.vmem %s2, %s351
      %p353 = scmp.lt.s32.totalorder %s22, 1
      %s354 = scalar_select %p353, %s22, 1
      %p355 = scmp.lt.s32.totalorder %s23, 0
      %s356 = scalar_select %p355, %s23, 0
      %s357 = sadd.s32 %s356, %s354
      %s358 = smul.addr %s357, 4
      %s359 = scalar_lea.vmem %s3, %s358
      %p360 = scmp.lt.s32.totalorder %s22, 1
      %s361 = scalar_select %p360, %s22, 1
      %s362 = scalar_lea.vmem %s4, %s361
      %p363 = scmp.lt.s32.totalorder %s22, 1
      %s364 = scalar_select %p363, %s22, 1
      %s365 = scalar_lea.vmem %s5, %s364
      %p366 = scmp.lt.s32.totalorder %s22, 1
      %s367 = scalar_select %p366, %s22, 1
      %s368 = scalar_lea.vmem %s6, %s367
      %p369 = scmp.eq.s32.totalorder %s23, 0
      // Predicated region
      $region37: #{advanced_distillation_loss.2} parent=35 // pred_check
        %p370 = pneg %p369
      $region38: #{advanced_distillation_loss.2} parent=35 // pred_check_branch
        %372 = sbr.rel (%p370) target = $region40
      $region39: #{advanced_distillation_loss.2} parent=35 // pred_region
        %373 = vst [vmem:[%s362] sm:$0x1] 0.0
        %374 = vst [vmem:[%s365] sm:$0x1] 0.0
        %375 = vst [vmem:[%s368] sm:$0x1] 0.0
      $region40: #{advanced_distillation_loss.2} parent=35 // pred_fallthru
        _
      %v376 = vld [vmem:[%s338] sm:$0xff]
      %v377 = vld [vmem:[%s345] sm:$0xff]
      %v378 = vld [vmem:[%s352] sm:$0xf]
      %v379 = vunpack.c.l.bf16 %v378
      %v380 = vld [vmem:[%s359] sm:$0xf]
      %v381 = vunpack.c.l.bf16 %v380
      %vm382 = vcmp.ge.s32.totalorder %v377, 1
      %vm383 = vcmp.le.s32.totalorder %v377, 5
      %vm384 = vmand %vm382, %vm383
      %vm385 = vcmp.ge.s32.totalorder %v377, 10
      %vm386 = vcmp.le.s32.totalorder %v377, 14
      %vm387 = vmand %vm385, %vm386
      %vm388 = vmor %vm384, %vm387
      %v389 = vsel %vm388, 2.0, 1.0
      %vm390 = vcmp.ne.s32.totalorder %v376, 4294967196
      %v391 = vsel %vm390, 1, 0
      %v392 = vcvt.s32.f32 %v391
      %393 = vmax.xlane.f32.xlu0 %v379
      %v394 = vpop.xlane.xlu0 %393
      %v395 = vsel %vm390, %v376, 0
      %v396 = vlaneseq
      %v397 = vand.u32 %v396, 127
      %398 = vset.pattern.permute.xlu0 0
      %399 = vperm.xlu0 %398, %v395
      %v400 = vpop.permute.xlu0 %399
      %vm401 = vcmp.eq.s32.totalorder %v397, %v400
      %v402 = vsel %vm401, %v379, 0.0
      %403 = vadd.xlane.f32.xlu0 %v402
      %v404 = vpop.xlane.xlu0 %403
      %v405 = vsub.f32 %v379, %v394
      %v406 = vmul.f32 %v405, 1.442695
      %v407 = vpow.pop %v406
      %408 = vadd.xlane.f32.xlu0 %v407
      %v409 = vpop.xlane.xlu0 %408
      %v410 = vlog2.pop %v409
      %v411 = vmul.f32 %v410, 0.6931472
      %v412 = vadd.f32 %v394, %v411
      %v413 = vsub.f32 %v412, %v404
      %v414 = vld [vmem:[%s362] sm:$0x1]
      %v415 = vmul.f32 %v413, %v389
      %v416 = vmul.f32 %v415, %v392
      %vm417 = vcmask 7168
      %v418 = vsel %vm417, %v416, 0.0
      %419 = vadd.xlane.f32.xlu0 %v418
      %v420 = vpop.xlane.xlu0 %419
      %v421 = vrot.slane %v420, 4
      %v422 = vadd.f32 %v420, %v421
      %v423 = vrot.slane %v422, 2
      %v424 = vadd.f32 %v422, %v423
      %v425 = vrot.slane %v424, 1
      %v426 = vadd.f32 %v424, %v425
      %s427 = vtos %v426
      %v428 = vstv %s427
      %v429 = vadd.f32 %v414, %v428
      %430 = vst [vmem:[%s362] sm:$0x1] %v429
      %v431 = vmul.f32 %v379, 0.25
      %v432 = vmul.f32 %v381, 0.25
      %v433 = vmul.f32 %v394, 0.25
      %v434 = vsub.f32 %v431, %v433
      %v435 = vmul.f32 %v434, 1.442695
      %v436 = vpow.pop %v435
      %437 = vadd.xlane.f32.xlu0 %v436
      %v438 = vpop.xlane.xlu0 %437
      %v439 = vlog2.pop %v438
      %v440 = vmul.f32 %v439, 0.6931472
      %v441 = vsub.f32 %v434, %v440
      %442 = vmax.xlane.f32.xlu0 %v432
      %v443 = vpop.xlane.xlu0 %442
      %v444 = vsub.f32 %v432, %v443
      %v445 = vmul.f32 %v444, 1.442695
      %v446 = vpow.pop %v445
      %447 = vadd.xlane.f32.xlu0 %v446
      %v448 = vpop.xlane.xlu0 %447
      %v449 = vrcp.pop %v448
      %v450 = vmul.f32 %v446, %v449
      %v451 = vlog2.pop %v448
      %v452 = vmul.f32 %v451, 0.6931472
      %v453 = vsub.f32 %v444, %v452
      %v454 = vld [vmem:[%s365] sm:$0x1]
      %v455 = vsub.f32 %v453, %v441
      %v456 = vmul.f32 %v450, %v455
      %457 = vadd.xlane.f32.xlu0 %v456
      %v458 = vpop.xlane.xlu0 %457
      %v459 = vrot.slane %v458, 4
      %v460 = vadd.f32 %v458, %v459
      %v461 = vrot.slane %v460, 2
      %v462 = vadd.f32 %v460, %v461
      %v463 = vrot.slane %v462, 1
      %v464 = vadd.f32 %v462, %v463
      %s465 = vtos %v464
      %v466 = vstv %s465
      %v467 = vadd.f32 %v454, %v466
      %468 = vst [vmem:[%s365] sm:$0x1] %v467
      %v470 = vrot.slane %v379, 1
      %vm472 = vcmask 1046528
      %v473 = vsel %vm472, %v470, %v470
      %v474 = vsub.f32 %v473, %v379
      %v475 = vmul.f32 %v474, %v474
      %476 = vadd.xlane.f32.xlu0 %v475
      %v477 = vpop.xlane.xlu0 %476
      %v478 = vrsqrt.pop %v477
      %v479 = vmul.f32 %v477, %v478
      %vm480 = vcmp.eq.f32.partialorder %v477, inf
      %v481 = vsel %vm480, %v477, %v479
      %vm482 = vcmp.eq.f32.partialorder %v477, 0.0
      %v483 = vand.u32 %v477, 2147483648
      %v484 = vsel %vm482, %v483, %v481
      %v485 = vlaneseq
      %v486 = vshrl.u32 %v485, 7
      %vm487 = vcmp.lt.s32.totalorder %v486, 7
      %v488 = vsel %vm487, %v484, 0.0
      %v489 = vsel %vm417, %v488, 0.0
      %490 = vadd.xlane.f32.xlu0 %v489
      %v491 = vpop.xlane.xlu0 %490
      %v492 = vrot.slane %v491, 4
      %v493 = vadd.f32 %v491, %v492
      %v494 = vrot.slane %v493, 2
      %v495 = vadd.f32 %v493, %v494
      %v496 = vrot.slane %v495, 1
      %v497 = vadd.f32 %v495, %v496
      %s498 = vtos %v497
      %v499 = vld [vmem:[#allocation2] sm:$0x1]
      %v500 = vsub.f32 %v379, %v499
      %v501 = vmul.f32 %v500, %v500
      %vm502 = vcmask 1040384
      %v503 = vsel %vm502, %v501, 0.0
      %504 = vadd.xlane.f32.xlu0 %v503
      %v505 = vpop.xlane.xlu0 %504
      %v506 = vrot.slane %v505, 4
      %v507 = vadd.f32 %v505, %v506
      %v508 = vrot.slane %v507, 2
      %v509 = vadd.f32 %v507, %v508
      %v510 = vrot.slane %v509, 1
      %v511 = vadd.f32 %v509, %v510
      %s512 = vtos %v511
      %v513 = vstv %s512
      %v514 = vrsqrt.pop %v513
      %v515 = vmul.f32 %v513, %v514
      %vm516 = vcmp.eq.f32.partialorder %v513, inf
      %v517 = vsel %vm516, %v513, %v515
      %vm518 = vcmp.eq.f32.partialorder %v513, 0.0
      %v519 = vand.u32 %v513, 2147483648
      %v520 = vsel %vm518, %v519, %v517
      %s521 = vtos %v520
      %v522 = vld [vmem:[%s368] sm:$0x1]
      %p523 = scmp.gt.s32.totalorder %s23, 0
      %s524 = scalar_select %p523, %s521, 0.0
      %s525 = sadd.f32 %s498, %s524
      %v526 = vstv %s525
      %v527 = vadd.f32 %v522, %v526
      %528 = vst [vmem:[%s368] sm:$0x1] %v527
      %529 = vst [vmem:[#allocation2 - $0x7] sm:$0x80] %v379
      %p530 = scmp.lt.s32.totalorder %s22, 1
      %s531 = scalar_select %p530, %s22, 1
      %s532 = scalar_lea.vmem %s4, %s531
      %p533 = scmp.lt.s32.totalorder %s22, 1
      %s534 = scalar_select %p533, %s22, 1
      %s535 = scalar_lea.vmem %s5, %s534
      %p536 = scmp.lt.s32.totalorder %s22, 1
      %s537 = scalar_select %p536, %s22, 1
      %s538 = scalar_lea.vmem %s6, %s537
      // Predicated region
      $region41: #{advanced_distillation_loss.2} parent=35 // pred_check
        %p539 = pneg %p160
      $region42: #{advanced_distillation_loss.2} parent=35 // pred_check_branch
        %541 = sbr.rel (%p539) target = $region44
      $region43: #{advanced_distillation_loss.2} parent=35 // pred_region
        _
      $region44: #{advanced_distillation_loss.2} parent=35 // pred_fallthru
        _
      // Predicated region
      $region45: #{advanced_distillation_loss.2} parent=35 // pred_check
        %p542 = pneg %p186
      $region46: #{advanced_distillation_loss.2} parent=35 // pred_check_branch
        %544 = sbr.rel (%p542) target = $region48
      $region47: #{advanced_distillation_loss.2} parent=35 // pred_region
        _
      $region48: #{advanced_distillation_loss.2} parent=35 // pred_fallthru
        _
      // Predicated region
      $region49: #{advanced_distillation_loss.2} parent=35 // pred_check
        %p545 = pneg %p212
      $region50: #{advanced_distillation_loss.2} parent=35 // pred_check_branch
        %547 = sbr.rel (%p545) target = $region52
      $region51: #{advanced_distillation_loss.2} parent=35 // pred_region
        _
      $region52: #{advanced_distillation_loss.2} parent=35 // pred_fallthru
        _
    $region36: #{advanced_distillation_loss.2} parent=5 // pred_fallthru
      _
    %p548 = scmp.le.s32.totalorder 2, %s13
    // Predicated region
    $region53: #{advanced_distillation_loss.2} parent=5 // pred_check
      %p549 = pneg %p548
    $region54: #{advanced_distillation_loss.2} parent=5 // pred_check_branch
      %551 = sbr.rel (%p549) target = $region56
    $region55: #{advanced_distillation_loss.2} parent=5 // pred_region
      %s552 = ssub.s32 %s13, 2
      // Predicated region
      $region57: #{advanced_distillation_loss.2} parent=55 // pred_check
        %p553 = pneg %p166
      $region58: #{advanced_distillation_loss.2} parent=55 // pred_check_branch
        %555 = sbr.rel (%p553) target = $region60
      $region59: #{advanced_distillation_loss.2} parent=55 // pred_region
        %p556 = scmp.lt.s32.totalorder %s24, 1
        %s557 = scalar_select %p556, %s24, 1
        %s558 = scalar_lea.vmem %s4, %s557
      $region60: #{advanced_distillation_loss.2} parent=55 // pred_fallthru
        _
      // Predicated region
      $region61: #{advanced_distillation_loss.2} parent=55 // pred_check
        %p559 = pneg %p192
      $region62: #{advanced_distillation_loss.2} parent=55 // pred_check_branch
        %561 = sbr.rel (%p559) target = $region64
      $region63: #{advanced_distillation_loss.2} parent=55 // pred_region
        %p562 = scmp.lt.s32.totalorder %s24, 1
        %s563 = scalar_select %p562, %s24, 1
        %s564 = scalar_lea.vmem %s5, %s563
      $region64: #{advanced_distillation_loss.2} parent=55 // pred_fallthru
        _
      // Predicated region
      $region65: #{advanced_distillation_loss.2} parent=55 // pred_check
        %p565 = pneg %p218
      $region66: #{advanced_distillation_loss.2} parent=55 // pred_check_branch
        %567 = sbr.rel (%p565) target = $region68
      $region67: #{advanced_distillation_loss.2} parent=55 // pred_region
        %p568 = scmp.lt.s32.totalorder %s24, 1
        %s569 = scalar_select %p568, %s24, 1
        %s570 = scalar_lea.vmem %s6, %s569
      $region68: #{advanced_distillation_loss.2} parent=55 // pred_fallthru
        _
    $region56: #{advanced_distillation_loss.2} parent=5 // pred_fallthru
      _
  $region6: #{advanced_distillation_loss.2} parent=0 // loop_footer
    %s17 = sadd.s32 1, %s13
  $region7: #{advanced_distillation_loss.2} parent=0 // loop_footer_branch
    %12 = sbr.rel target = $region3
  $region8: #{advanced_distillation_loss.2} parent=0 // loop_exit
    _

// kernel: advanced_distillation_loss.3
$region0: #{advanced_distillation_loss.3}
  #allocation0 [shape = 'u32[]', space=smem, size = 0x4, offset = 0x4, fixed_abs, tag = 'smem constant byte address 0x4 - core index']
  #allocation1 [shape = 'u32[144,128]{1,0:T(1,128)}', space=vmem, size = 0x12000, scoped, tag = 'internal scratch']
  #allocation2 [shape = 'f32[8,8]{1,0:T(8,128)}', space=vmem, size = 0x1000, scoped, tag = 'scratch operand']
  %s0 = inlined_call_operand.vmem [shape: bf16[2,4,8,8], index: 0, kind: input, shape index: {}]
  %s1 = inlined_call_operand.vmem [shape: bf16[2,4,8,8], index: 1, kind: input, shape index: {}]
  %s2 = inlined_call_operand.vmem [shape: f32[2,1,128], index: 2, kind: output, shape index: {}]
  %s3 = sld [smem:[#allocation0]]
  $region53: #{advanced_distillation_loss.3} parent=0
    _
  %s5 = ssub.s32 1, %s3
  %s6 = scalar_select 0, %s5, %s3
  loop: start=0, step=1, limit=10
  $region2: #{advanced_distillation_loss.3} parent=0 // loop_pre_header
    _
  $region3: #{advanced_distillation_loss.3} parent=0 // loop_header
    %s8 = sphi 0, %s12
    %p9 = scmp.ge.s32.totalorder %s8, 10
    %s15 = sphi 0, %s34
    %s16 = sphi 0, %s30
    %s17 = sphi 0, %s26
    %s18 = sphi 0, %s15
    %s19 = sphi 0, %s16
    %s20 = sphi 0, %s17
    %s21 = sphi 0, %s18
    %s22 = sphi 0, %s19
    %s23 = sphi 0, %s20
    %s41 = sphi 0, %s43
    %s44 = sphi 0, %s41
    %s45 = sphi 0, %s44
    %s61 = sphi 0, %s45
    %s71 = sphi 0, %s73
    %s74 = sphi 0, %s71
    %s75 = sphi 0, %s74
    %s91 = sphi 0, %s75
    %s97 = sphi 0, %s99
    %s100 = sphi 0, %s97
    %s101 = sphi 0, %s100
    %s117 = sphi 0, %s101
  $region4: #{advanced_distillation_loss.3} parent=0 // loop_header_branch
    %11 = sbr.rel (%p9) target = $region8
  $region5: #{advanced_distillation_loss.3} parent=0 // loop_body
    %s13 = ssub.s32 %s8, 1
    %s14 = ssub.s32 %s8, 2
    %s24 = sadd.s32 1, %s17
    %p25 = scmp.ge.s32.totalorder %s24, 4
    %s26 = scalar_select %p25, 0, %s24
    %s27 = sadd.s32 1, %s16
    %s28 = scalar_select %p25, %s27, %s16
    %p29 = scmp.ge.s32.totalorder %s28, 1
    %s30 = scalar_select %p29, 0, %s28
    %s31 = sadd.s32 1, %s15
    %s32 = scalar_select %p29, %s31, %s15
    %p33 = scmp.ge.s32.totalorder %s32, 2
    %s34 = scalar_select %p33, 0, %s32
    %s35 = ssub.s32 %s15, %s34
    %s36 = ssub.s32 %s17, %s26
    %s37 = sor.u32 %s35, %s36
    %s38 = ssub.s32 %s16, %s30
    %s39 = sor.u32 %s37, %s38
    %p40 = scmp.eq.s32.totalorder %s39, 0
    %s42 = sadd.s32 %s41, 1
    %s43 = scalar_select %p40, %s41, %s42
    %p46 = pneg %p40
    %p47 = scmp.eq.s32.totalorder %s8, 7
    %p48 = por %p46, %p47
    %p49 = scmp.ne.s32.totalorder %s41, %s44
    %p50 = scmp.eq.s32.totalorder %s8, 0
    %p51 = por %p49, %p50
    %p52 = scmp.ne.s32.totalorder %s41, %s44
    %p53 = scmp.eq.s32.totalorder %s13, 7
    %p54 = por %p52, %p53
    %p55 = scmp.ne.s32.totalorder %s44, %s45
    %p56 = scmp.eq.s32.totalorder %s13, 0
    %p57 = por %p55, %p56
    %p58 = scmp.ne.s32.totalorder %s44, %s45
    %p59 = scmp.eq.s32.totalorder %s14, 7
    %p60 = por %p58, %p59
    %p62 = scmp.ne.s32.totalorder %s45, %s61
    %p63 = scmp.eq.s32.totalorder %s14, 0
    %p64 = por %p62, %p63
    %s65 = ssub.s32 %s15, %s34
    %s66 = ssub.s32 %s17, %s26
    %s67 = sor.u32 %s65, %s66
    %s68 = ssub.s32 %s16, %s30
    %s69 = sor.u32 %s67, %s68
    %p70 = scmp.eq.s32.totalorder %s69, 0
    %s72 = sadd.s32 %s71, 1
    %s73 = scalar_select %p70, %s71, %s72
    %p76 = pneg %p70
    %p77 = scmp.eq.s32.totalorder %s8, 7
    %p78 = por %p76, %p77
    %p79 = scmp.ne.s32.totalorder %s71, %s74
    %p80 = scmp.eq.s32.totalorder %s8, 0
    %p81 = por %p79, %p80
    %p82 = scmp.ne.s32.totalorder %s71, %s74
    %p83 = scmp.eq.s32.totalorder %s13, 7
    %p84 = por %p82, %p83
    %p85 = scmp.ne.s32.totalorder %s74, %s75
    %p86 = scmp.eq.s32.totalorder %s13, 0
    %p87 = por %p85, %p86
    %p88 = scmp.ne.s32.totalorder %s74, %s75
    %p89 = scmp.eq.s32.totalorder %s14, 7
    %p90 = por %p88, %p89
    %p92 = scmp.ne.s32.totalorder %s75, %s91
    %p93 = scmp.eq.s32.totalorder %s14, 0
    %p94 = por %p92, %p93
    %s95 = ssub.s32 %s15, %s34
    %p96 = scmp.eq.s32.totalorder %s95, 0
    %s98 = sadd.s32 %s97, 1
    %s99 = scalar_select %p96, %s97, %s98
    %p102 = pneg %p96
    %p103 = scmp.eq.s32.totalorder %s8, 7
    %p104 = por %p102, %p103
    %p105 = scmp.ne.s32.totalorder %s97, %s100
    %p106 = scmp.eq.s32.totalorder %s8, 0
    %p107 = por %p105, %p106
    %p108 = scmp.ne.s32.totalorder %s97, %s100
    %p109 = scmp.eq.s32.totalorder %s13, 7
    %p110 = por %p108, %p109
    %p111 = scmp.ne.s32.totalorder %s100, %s101
    %p112 = scmp.eq.s32.totalorder %s13, 0
    %p113 = por %p111, %p112
    %p114 = scmp.ne.s32.totalorder %s100, %s101
    %p115 = scmp.eq.s32.totalorder %s14, 7
    %p116 = por %p114, %p115
    %p118 = scmp.ne.s32.totalorder %s101, %s117
    %p119 = scmp.eq.s32.totalorder %s14, 0
    %p120 = por %p118, %p119
    %p121 = scmp.le.s32.totalorder 1, %s8
    %p122 = scmp.lt.s32.totalorder %s8, 9
    %p123 = pnand %p121, %p122
    %p124 = pneg %p123
    // Predicated region
    $region9: #{advanced_distillation_loss.3} parent=5 // pred_check
      _
    $region10: #{advanced_distillation_loss.3} parent=5 // pred_check_branch
      %126 = sbr.rel (%p123) target = $region12
    $region11: #{advanced_distillation_loss.3} parent=5 // pred_region
      %s127 = ssub.s32 %s8, 1
    $region12: #{advanced_distillation_loss.3} parent=5 // pred_fallthru
      _
    %p128 = scmp.lt.s32.totalorder %s8, 8
    // Predicated region
    $region13: #{advanced_distillation_loss.3} parent=5 // pred_check
      %p129 = pneg %p128
    $region14: #{advanced_distillation_loss.3} parent=5 // pred_check_branch
      %131 = sbr.rel (%p129) target = $region16
    $region15: #{advanced_distillation_loss.3} parent=5 // pred_region
      // Predicated region
      $region17: #{advanced_distillation_loss.3} parent=15 // pred_check
        %p132 = pneg %p51
      $region18: #{advanced_distillation_loss.3} parent=15 // pred_check_branch
        %134 = sbr.rel (%p132) target = $region20
      $region19: #{advanced_distillation_loss.3} parent=15 // pred_region
        %p135 = scmp.lt.s32.totalorder %s15, 1
        %s136 = scalar_select %p135, %s15, 1
        %p137 = scmp.lt.s32.totalorder %s17, 3
        %s138 = scalar_select %p137, %s17, 3
        %p139 = scmp.lt.s32.totalorder %s16, 0
        %s140 = scalar_select %p139, %s16, 0
        %s141 = sadd.s32 %s140, %s138
        %s142 = smul.addr %s136, 4
        %s143 = sadd.s32 %s141, %s142
        %s144 = smul.addr %s143, 4
        %s145 = scalar_lea.vmem %s0, %s144
      $region20: #{advanced_distillation_loss.3} parent=15 // pred_fallthru
        _
      // Predicated region
      $region21: #{advanced_distillation_loss.3} parent=15 // pred_check
        %p146 = pneg %p81
      $region22: #{advanced_distillation_loss.3} parent=15 // pred_check_branch
        %148 = sbr.rel (%p146) target = $region24
      $region23: #{advanced_distillation_loss.3} parent=15 // pred_region
        %p149 = scmp.lt.s32.totalorder %s15, 1
        %s150 = scalar_select %p149, %s15, 1
        %p151 = scmp.lt.s32.totalorder %s17, 3
        %s152 = scalar_select %p151, %s17, 3
        %p153 = scmp.lt.s32.totalorder %s16, 0
        %s154 = scalar_select %p153, %s16, 0
        %s155 = sadd.s32 %s154, %s152
        %s156 = smul.addr %s150, 4
        %s157 = sadd.s32 %s155, %s156
        %s158 = smul.addr %s157, 4
        %s159 = scalar_lea.vmem %s1, %s158
      $region24: #{advanced_distillation_loss.3} parent=15 // pred_fallthru
        _
    $region16: #{advanced_distillation_loss.3} parent=5 // pred_fallthru
      _
    %p160 = scmp.le.s32.totalorder 1, %s8
    %p161 = scmp.lt.s32.totalorder %s8, 9
    %p162 = pnand %p160, %p161
    %p163 = pneg %p162
    // Predicated region
    $region25: #{advanced_distillation_loss.3} parent=5 // pred_check
      _
    $region26: #{advanced_distillation_loss.3} parent=5 // pred_check_branch
      %165 = sbr.rel (%p162) target = $region28
    $region27: #{advanced_distillation_loss.3} parent=5 // pred_region
      %s166 = ssub.s32 %s8, 1
      %p167 = scmp.lt.s32.totalorder %s18, 1
      %s168 = scalar_select %p167, %s18, 1
      %p169 = scmp.lt.s32.totalorder %s20, 3
      %s170 = scalar_select %p169, %s20, 3
      %p171 = scmp.lt.s32.totalorder %s19, 0
      %s172 = scalar_select %p171, %s19, 0
      %s173 = sadd.s32 %s172, %s170
      %s174 = smul.addr %s168, 4
      %s175 = sadd.s32 %s173, %s174
      %s176 = smul.addr %s175, 4
      %s177 = scalar_lea.vmem %s0, %s176
      %p178 = pneg %p57
      %p179 = pneg %p54
      %p180 = scmp.lt.s32.totalorder %s18, 1
      %s181 = scalar_select %p180, %s18, 1
      %p182 = scmp.lt.s32.totalorder %s20, 3
      %s183 = scalar_select %p182, %s20, 3
      %p184 = scmp.lt.s32.totalorder %s19, 0
      %s185 = scalar_select %p184, %s19, 0
      %s186 = sadd.s32 %s185, %s183
      %s187 = smul.addr %s181, 4
      %s188 = sadd.s32 %s186, %s187
      %s189 = smul.addr %s188, 4
      %s190 = scalar_lea.vmem %s1, %s189
      %p191 = pneg %p87
      %p192 = pneg %p84
      %p193 = pneg %p113
      %p194 = pneg %p110
      %p195 = scmp.lt.s32.totalorder %s18, 1
      %s196 = scalar_select %p195, %s18, 1
      %s197 = scalar_lea.vmem %s2, %s196
      %p198 = scmp.lt.s32.totalorder %s18, 1
      %s199 = scalar_select %p198, %s18, 1
      %p200 = scmp.lt.s32.totalorder %s20, 3
      %s201 = scalar_select %p200, %s20, 3
      %p202 = scmp.lt.s32.totalorder %s19, 0
      %s203 = scalar_select %p202, %s19, 0
      %s204 = sadd.s32 %s203, %s201
      %s205 = smul.addr %s199, 4
      %s206 = sadd.s32 %s204, %s205
      %s207 = smul.addr %s206, 4
      %s208 = scalar_lea.vmem %s0, %s207
      %p209 = scmp.lt.s32.totalorder %s18, 1
      %s210 = scalar_select %p209, %s18, 1
      %p211 = scmp.lt.s32.totalorder %s20, 3
      %s212 = scalar_select %p211, %s20, 3
      %p213 = scmp.lt.s32.totalorder %s19, 0
      %s214 = scalar_select %p213, %s19, 0
      %s215 = sadd.s32 %s214, %s212
      %s216 = smul.addr %s210, 4
      %s217 = sadd.s32 %s215, %s216
      %s218 = smul.addr %s217, 4
      %s219 = scalar_lea.vmem %s1, %s218
      %p220 = scmp.lt.s32.totalorder %s18, 1
      %s221 = scalar_select %p220, %s18, 1
      %s222 = scalar_lea.vmem %s2, %s221
      %p223 = scmp.eq.s32.totalorder %s19, 0
      %p224 = scmp.eq.s32.totalorder %s20, 0
      %p225 = pnand %p223, %p224
      %p226 = pneg %p225
      // Predicated region
      $region29: #{advanced_distillation_loss.3} parent=27 // pred_check
        _
      $region30: #{advanced_distillation_loss.3} parent=27 // pred_check_branch
        %228 = sbr.rel (%p225) target = $region32
      $region31: #{advanced_distillation_loss.3} parent=27 // pred_region
        %229 = vst [vmem:[%s222] sm:$0x1] 0.0
      $region32: #{advanced_distillation_loss.3} parent=27 // pred_fallthru
        _
      // Predicated region
      $region33: #{advanced_distillation_loss.3} parent=27 // pred_check
        %p230 = pneg %p224
      $region34: #{advanced_distillation_loss.3} parent=27 // pred_check_branch
        %232 = sbr.rel (%p230) target = $region36
      $region35: #{advanced_distillation_loss.3} parent=27 // pred_region
        %vm233 = vcmask 64512
        %234 = vst.msk [vmem:[#allocation2] sm:$0xff] %vm233, 0.0
      $region36: #{advanced_distillation_loss.3} parent=27 // pred_fallthru
        _
      %v235 = vld [vmem:[#allocation2] sm:$0xff]
      %v236 = vld [vmem:[%s208] sm:$0xf]
      %v237 = vunpack.c.l.bf16 %v236
      %v238 = vld [vmem:[%s219] sm:$0xf]
      %v239 = vunpack.c.l.bf16 %v238
      %v240 = vsub.f32 %v237, %v239
      %v241 = vadd.f32 %v235, %v240
      %vm242 = vcmask 64512
      %243 = vst.msk [vmem:[#allocation2] sm:$0xff] %vm242, %v241
      %p244 = scmp.eq.s32.totalorder %s20, 3
      // Predicated region
      $region37: #{advanced_distillation_loss.3} parent=27 // pred_check
        %p245 = pneg %p244
      $region38: #{advanced_distillation_loss.3} parent=27 // pred_check_branch
        %247 = sbr.rel (%p245) target = $region40
      $region39: #{advanced_distillation_loss.3} parent=27 // pred_region
        %v248 = vld [vmem:[#allocation2] sm:$0xff]
        %v249 = vmul.f32 %v248, 0.25
        %v250 = vld [vmem:[%s222] sm:$0x1]
        %v251 = vmul.f32 %v249, %v249
        %v252 = vsel %vm242, %v251, 0.0
        %253 = vadd.xlane.f32.xlu0 %v252
        %v254 = vpop.xlane.xlu0 %253
        %v255 = vrot.slane %v254, 4
        %v256 = vadd.f32 %v254, %v255
        %v257 = vrot.slane %v256, 2
        %v258 = vadd.f32 %v256, %v257
        %v259 = vrot.slane %v258, 1
        %v260 = vadd.f32 %v258, %v259
        %s261 = vtos %v260
        %v262 = vstv %s261
        %v263 = vadd.f32 %v250, %v262
        %264 = vst [vmem:[%s222] sm:$0x1] %v263
      $region40: #{advanced_distillation_loss.3} parent=27 // pred_fallthru
        _
      %p265 = scmp.lt.s32.totalorder %s18, 1
      %s266 = scalar_select %p265, %s18, 1
      %s267 = scalar_lea.vmem %s2, %s266
      // Predicated region
      $region41: #{advanced_distillation_loss.3} parent=27 // pred_check
        %p268 = pneg %p110
      $region42: #{advanced_distillation_loss.3} parent=27 // pred_check_branch
        %270 = sbr.rel (%p268) target = $region44
      $region43: #{advanced_distillation_loss.3} parent=27 // pred_region
        _
      $region44: #{advanced_distillation_loss.3} parent=27 // pred_fallthru
        _
    $region28: #{advanced_distillation_loss.3} parent=5 // pred_fallthru
      _
    %p271 = scmp.le.s32.totalorder 2, %s8
    // Predicated region
    $region45: #{advanced_distillation_loss.3} parent=5 // pred_check
      %p272 = pneg %p271
    $region46: #{advanced_distillation_loss.3} parent=5 // pred_check_branch
      %274 = sbr.rel (%p272) target = $region48
    $region47: #{advanced_distillation_loss.3} parent=5 // pred_region
      %s275 = ssub.s32 %s8, 2
      // Predicated region
      $region49: #{advanced_distillation_loss.3} parent=47 // pred_check
        %p276 = pneg %p116
      $region50: #{advanced_distillation_loss.3} parent=47 // pred_check_branch
        %278 = sbr.rel (%p276) target = $region52
      $region51: #{advanced_distillation_loss.3} parent=47 // pred_region
        %p279 = scmp.lt.s32.totalorder %s21, 1
        %s280 = scalar_select %p279, %s21, 1
        %s281 = scalar_lea.vmem %s2, %s280
      $region52: #{advanced_distillation_loss.3} parent=47 // pred_fallthru
        _
    $region48: #{advanced_distillation_loss.3} parent=5 // pred_fallthru
      _
  $region6: #{advanced_distillation_loss.3} parent=0 // loop_footer
    %s12 = sadd.s32 1, %s8
  $region7: #{advanced_distillation_loss.3} parent=0 // loop_footer_branch
    %7 = sbr.rel target = $region3
  $region8: #{advanced_distillation_loss.3} parent=0 // loop_exit
    _

</llo_original>
